<compile_context>
chip_gen: v6e
topology: v6e:2x2x1
jax: 0.10.0
libtpu: 0.0.40
codegen_flags: <defaults>
</compile_context>

<pallas_src>
import functools

import jax
import jax.numpy as jnp
from jax.experimental import pallas as pl
from jax.experimental.pallas import tpu as pltpu  # noqa: F401  (TPU backend import)

OUT_LANES = 128  # lane-dense output slab width (multiple of the 128-lane vreg)


def dqn_fused_kernel(x_ref, p_ref, o_ref, *, n_act):
    """Fused Linear(4,64)->Tanh->Linear(64,n_act) + greedy argmax.

    p_ref row layout (see pack_params):
      rows [0, in_f)               : w1 (in_f, hidden)
      row  in_f                    : b1
      rows [in_f+1, in_f+1+n_act)  : w2^T (each action's weights lane-contiguous)
      row  in_f+1+n_act            : b2 in lanes 0..n_act-1, rest zero
    o_ref: (B, OUT_LANES) f32; lanes 0..n_act-1 = q, lane n_act = action (f32).
    """
    x = x_ref[...]                            # (B, in_f) f32
    b = x_ref.shape[0]
    in_f = x_ref.shape[1]
    out_lanes = o_ref.shape[1]

    row_b1 = in_f
    row_w2 = in_f + 1
    row_b2 = in_f + 1 + n_act

    # ---- layer 1 on the VPU: h = tanh(b1 + sum_k x[:, k] * w1[k, :]) --------
    # K=4 would waste the MXU; 4 broadcast-FMAs finish in a handful of bundles.
    h = p_ref[row_b1:row_b1 + 1, :] + x[:, 0:1] * p_ref[0:1, :]   # (B, hidden)
    for k in range(1, in_f):                                      # static unroll
        h = h + x[:, k:k + 1] * p_ref[k:k + 1, :]
    h = jnp.tanh(h)                                               # EUP

    # ---- layer 2: per-action multiply (VPU) + lane reduction (XLU) ----------
    b2_row = p_ref[row_b2:row_b2 + 1, :]                          # (1, hidden), one load
    q_cols = []
    for a in range(n_act):                                        # static unroll
        qa = jnp.sum(h * p_ref[row_w2 + a:row_w2 + a + 1, :],
                     axis=-1, keepdims=True)                      # (B, 1)
        qa = qa + b2_row[0:1, a:a + 1]                            # + b2[a]
        q_cols.append(qa)

    # ---- fused argmax ('act'), first-max tie-break like torch/jnp argmax ----
    if n_act == 2:
        act_f = (q_cols[1] > q_cols[0]).astype(jnp.float32)       # (B, 1)
    else:
        best_q = q_cols[0]
        act_f = jnp.zeros_like(best_q)
        for a in range(1, n_act):
            better = q_cols[a] > best_q                           # strict >
            best_q = jnp.where(better, q_cols[a], best_q)
            act_f = jnp.where(better, jnp.full_like(act_f, float(a)), act_f)

    # ---- build single lane-dense output slab, one unmasked store ------------
    lane = jax.lax.broadcasted_iota(jnp.int32, (b, out_lanes), 1)
    slab = jnp.where(lane == n_act, act_f,
                     jnp.zeros((b, out_lanes), jnp.float32))
    for a in range(n_act):
        slab = jnp.where(lane == a, q_cols[a], slab)
    o_ref[...] = slab


def pack_params(w1, b1, w2, b2):
    """Pack (w1, b1, w2, b2) into one sublane-aligned (rows, hidden) f32 slab.

    Pack once per parameter update; reuse across act()/forward() calls.
    """
    in_f, hidden = w1.shape
    n_act = w2.shape[1]
    b2_row = jnp.zeros((1, hidden), jnp.float32).at[0, :n_act].set(
        b2.astype(jnp.float32))
    slab = jnp.concatenate(
        [
            w1.astype(jnp.float32),                       # rows [0, in_f)
            b1.reshape(1, hidden).astype(jnp.float32),    # row in_f
            w2.T.astype(jnp.float32),                     # rows [in_f+1, in_f+1+n_act)
            b2_row,                                       # row in_f+1+n_act
        ],
        axis=0,
    )
    rows = slab.shape[0]
    rows_padded = ((rows + 7) // 8) * 8                   # sublane-align
    if rows_padded != rows:
        slab = jnp.pad(slab, ((0, rows_padded - rows), (0, 0)))
    return slab


def network_forward_packed(x, params, n_act):
    """Forward + greedy action from pre-packed params. Returns (q (B,n_act), act (B,) int32)."""
    B, in_f = x.shape
    rows, hidden = params.shape

    kernel = functools.partial(dqn_fused_kernel, n_act=n_act)
    cost = pl.CostEstimate(
        flops=2 * B * (in_f * hidden + hidden * n_act),
        transcendentals=B * hidden,
        bytes_accessed=(B * in_f + rows * hidden + B * OUT_LANES) * 4,
    )

    out = pl.pallas_call(
        kernel,
        out_shape=jax.ShapeDtypeStruct((B, OUT_LANES), jnp.float32),
        in_specs=[
            pl.BlockSpec((B, in_f), lambda: (0, 0)),
            pl.BlockSpec((rows, hidden), lambda: (0, 0)),
        ],
        out_specs=pl.BlockSpec((B, OUT_LANES), lambda: (0, 0)),
        cost_estimate=cost,
    )(x, params)

    q_values = out[:, :n_act]
    actions = out[:, n_act].astype(jnp.int32)
    return q_values, actions


def network_forward(x, w1, b1, w2, b2):
    """Convenience wrapper: packs params then runs the fused kernel."""
    n_act = w2.shape[1]
    params = pack_params(w1, b1, w2, b2)
    return network_forward_packed(x, params, n_act)


def init_params(key, in_features=4, hidden=64, n_actions=2):
    """Deterministic init mimicking nn.Linear default (uniform +/- 1/sqrt(fan_in))."""
    k1, k2, k3, k4 = jax.random.split(key, 4)
    bound1 = 1.0 / jnp.sqrt(in_features)
    bound2 = 1.0 / jnp.sqrt(hidden)
    w1 = jax.random.uniform(k1, (in_features, hidden), jnp.float32, -bound1, bound1)
    b1 = jax.random.uniform(k2, (hidden,), jnp.float32, -bound1, bound1)
    w2 = jax.random.uniform(k3, (hidden, n_actions), jnp.float32, -bound2, bound2)
    b2 = jax.random.uniform(k4, (n_actions,), jnp.float32, -bound2, bound2)
    return w1, b1, w2, b2


if __name__ == "__main__":
    key = jax.random.PRNGKey(0)
    kx, kp = jax.random.split(key)

    # CartPole-v1: observation dim = 4, actions = 2. Batch of 8 (f32 sublane
    # width) so input loads stay unmasked.
    B, IN_F, HID, N_ACT = 8, 4, 64, 2
    x = jax.random.normal(kx, (B, IN_F), dtype=jnp.float32)
    w1, b1, w2, b2 = init_params(kp, IN_F, HID, N_ACT)

    q_values, actions = network_forward(x, w1, b1, w2, b2)
    q_values = jax.block_until_ready(q_values)
    actions = jax.block_until_ready(actions)

    # Reference check (plain JAX) for forward + act semantics.
    ref_q = jnp.tanh(x @ w1 + b1) @ w2 + b2
    ref_act = jnp.argmax(ref_q, axis=1).astype(jnp.int32)
    assert q_values.shape == (B, N_ACT)
    assert actions.shape == (B,)
    assert jnp.allclose(q_values, ref_q, atol=1e-5, rtol=1e-5)
    assert jnp.array_equal(actions, ref_act)

    # TODO(synk): gym env interaction / replay buffer / training loop from dqn.py
    # are host-side control flow and are not part of the kernel.

    print("KERNEL_OK")
</pallas_src>

<mosaic_0001>
module attributes {stable_mosaic.version = 11 : i64} {
  func.func @dqn_fused_kernel(%arg0: memref<8x4xf32, #tpu.memory_space<vmem>>, %arg1: memref<8x64xf32, #tpu.memory_space<vmem>>, %arg2: memref<8x128xf32, #tpu.memory_space<vmem>>) attributes {dimension_semantics = [], scalar_prefetch = 0 : i64, scratch_operands = 0 : i64, tpu.core_type = #tpu.core_type<tc>} {
    %c0 = arith.constant 0 : index
    %c0_0 = arith.constant 0 : index
    %0 = vector.load %arg0[%c0, %c0_0] : memref<8x4xf32, #tpu.memory_space<vmem>>, vector<8x4xf32>
    %c4 = arith.constant 4 : index
    %c0_1 = arith.constant 0 : index
    %1 = vector.load %arg1[%c4, %c0_1] : memref<8x64xf32, #tpu.memory_space<vmem>>, vector<1x64xf32>
    %2 = vector.extract_strided_slice %0 {offsets = [0, 0], sizes = [8, 1], strides = [1, 1]} : vector<8x4xf32> to vector<8x1xf32>
    %c0_2 = arith.constant 0 : index
    %c0_3 = arith.constant 0 : index
    %3 = vector.load %arg1[%c0_2, %c0_3] : memref<8x64xf32, #tpu.memory_space<vmem>>, vector<1x64xf32>
    %4 = vector.broadcast %2 : vector<8x1xf32> to vector<8x64xf32>
    %5 = vector.broadcast %3 : vector<1x64xf32> to vector<8x64xf32>
    %6 = arith.mulf %4, %5 : vector<8x64xf32>
    %7 = vector.broadcast %1 : vector<1x64xf32> to vector<8x64xf32>
    %8 = arith.addf %7, %6 : vector<8x64xf32>
    %9 = vector.extract_strided_slice %0 {offsets = [0, 1], sizes = [8, 1], strides = [1, 1]} : vector<8x4xf32> to vector<8x1xf32>
    %c1 = arith.constant 1 : index
    %c0_4 = arith.constant 0 : index
    %10 = vector.load %arg1[%c1, %c0_4] : memref<8x64xf32, #tpu.memory_space<vmem>>, vector<1x64xf32>
    %11 = vector.broadcast %9 : vector<8x1xf32> to vector<8x64xf32>
    %12 = vector.broadcast %10 : vector<1x64xf32> to vector<8x64xf32>
    %13 = arith.mulf %11, %12 : vector<8x64xf32>
    %14 = arith.addf %8, %13 : vector<8x64xf32>
    %15 = vector.extract_strided_slice %0 {offsets = [0, 2], sizes = [8, 1], strides = [1, 1]} : vector<8x4xf32> to vector<8x1xf32>
    %c2 = arith.constant 2 : index
    %c0_5 = arith.constant 0 : index
    %16 = vector.load %arg1[%c2, %c0_5] : memref<8x64xf32, #tpu.memory_space<vmem>>, vector<1x64xf32>
    %17 = vector.broadcast %15 : vector<8x1xf32> to vector<8x64xf32>
    %18 = vector.broadcast %16 : vector<1x64xf32> to vector<8x64xf32>
    %19 = arith.mulf %17, %18 : vector<8x64xf32>
    %20 = arith.addf %14, %19 : vector<8x64xf32>
    %21 = vector.extract_strided_slice %0 {offsets = [0, 3], sizes = [8, 1], strides = [1, 1]} : vector<8x4xf32> to vector<8x1xf32>
    %c3 = arith.constant 3 : index
    %c0_6 = arith.constant 0 : index
    %22 = vector.load %arg1[%c3, %c0_6] : memref<8x64xf32, #tpu.memory_space<vmem>>, vector<1x64xf32>
    %23 = vector.broadcast %21 : vector<8x1xf32> to vector<8x64xf32>
    %24 = vector.broadcast %22 : vector<1x64xf32> to vector<8x64xf32>
    %25 = arith.mulf %23, %24 : vector<8x64xf32>
    %26 = arith.addf %20, %25 : vector<8x64xf32>
    %27 = math.tanh %26 : vector<8x64xf32>
    %c7 = arith.constant 7 : index
    %c0_7 = arith.constant 0 : index
    %28 = vector.load %arg1[%c7, %c0_7] : memref<8x64xf32, #tpu.memory_space<vmem>>, vector<1x64xf32>
    %c5 = arith.constant 5 : index
    %c0_8 = arith.constant 0 : index
    %29 = vector.load %arg1[%c5, %c0_8] : memref<8x64xf32, #tpu.memory_space<vmem>>, vector<1x64xf32>
    %30 = vector.broadcast %29 : vector<1x64xf32> to vector<8x64xf32>
    %31 = arith.mulf %27, %30 : vector<8x64xf32>
    %cst = arith.constant dense<0.000000e+00> : vector<8xf32>
    %32 = vector.multi_reduction <add>, %31, %cst [1] : vector<8x64xf32> to vector<8xf32>
    %33 = vector.shape_cast %32 : vector<8xf32> to vector<8x1xf32>
    %34 = vector.extract_strided_slice %28 {offsets = [0, 0], sizes = [1, 1], strides = [1, 1]} : vector<1x64xf32> to vector<1x1xf32>
    %35 = vector.broadcast %34 : vector<1x1xf32> to vector<8x1xf32>
    %36 = arith.addf %33, %35 : vector<8x1xf32>
    %c6 = arith.constant 6 : index
    %c0_9 = arith.constant 0 : index
    %37 = vector.load %arg1[%c6, %c0_9] : memref<8x64xf32, #tpu.memory_space<vmem>>, vector<1x64xf32>
    %38 = vector.broadcast %37 : vector<1x64xf32> to vector<8x64xf32>
    %39 = arith.mulf %27, %38 : vector<8x64xf32>
    %cst_10 = arith.constant dense<0.000000e+00> : vector<8xf32>
    %40 = vector.multi_reduction <add>, %39, %cst_10 [1] : vector<8x64xf32> to vector<8xf32>
    %41 = vector.shape_cast %40 : vector<8xf32> to vector<8x1xf32>
    %42 = vector.extract_strided_slice %28 {offsets = [0, 1], sizes = [1, 1], strides = [1, 1]} : vector<1x64xf32> to vector<1x1xf32>
    %43 = vector.broadcast %42 : vector<1x1xf32> to vector<8x1xf32>
    %44 = arith.addf %41, %43 : vector<8x1xf32>
    %45 = arith.cmpf ogt, %44, %36 : vector<8x1xf32>
    %46 = arith.extui %45 : vector<8x1xi1> to vector<8x1xi32>
    %47 = arith.sitofp %46 : vector<8x1xi32> to vector<8x1xf32>
    %48 = tpu.iota {dimensions = array<i32: 1>} : vector<8x128xi32>
    %c2_i32 = arith.constant 2 : i32
    %49 = vector.broadcast %c2_i32 : i32 to vector<8x128xi32>
    %50 = arith.cmpi eq, %48, %49 : vector<8x128xi32>
    %cst_11 = arith.constant 0.000000e+00 : f32
    %51 = vector.broadcast %cst_11 : f32 to vector<8x128xf32>
    %52 = vector.shape_cast %47 : vector<8x1xf32> to vector<8x1xf32>
    %53 = vector.broadcast %52 : vector<8x1xf32> to vector<8x128xf32>
    %54 = arith.select %50, %53, %51 : vector<8x128xi1>, vector<8x128xf32>
    %c0_i32 = arith.constant 0 : i32
    %55 = vector.broadcast %c0_i32 : i32 to vector<8x128xi32>
    %56 = arith.cmpi eq, %48, %55 : vector<8x128xi32>
    %57 = vector.shape_cast %36 : vector<8x1xf32> to vector<8x1xf32>
    %58 = vector.broadcast %57 : vector<8x1xf32> to vector<8x128xf32>
    %59 = arith.select %56, %58, %54 : vector<8x128xi1>, vector<8x128xf32>
    %c1_i32 = arith.constant 1 : i32
    %60 = vector.broadcast %c1_i32 : i32 to vector<8x128xi32>
    %61 = arith.cmpi eq, %48, %60 : vector<8x128xi32>
    %62 = vector.shape_cast %44 : vector<8x1xf32> to vector<8x1xf32>
    %63 = vector.broadcast %62 : vector<8x1xf32> to vector<8x128xf32>
    %64 = arith.select %61, %63, %59 : vector<8x128xi1>, vector<8x128xf32>
    %c0_12 = arith.constant 0 : index
    %c0_13 = arith.constant 0 : index
    %65 = vector.load %arg2[%c0_12, %c0_13] : memref<8x128xf32, #tpu.memory_space<vmem>>, vector<8x128xf32>
    tpu.vector_store %arg2[%c0_12, %c0_13], %64 {strides = array<i32>} : memref<8x128xf32, #tpu.memory_space<vmem>>, vector<8x128xf32>,
    return
  }
}

</mosaic_0001>

<llo_original>
// kernel: tpu_custom_call.1
$region0: #{tpu_custom_call.1}
  #allocation0 [shape = 'u32[]', space=smem, size = 0x4, offset = 0x4, fixed_abs, tag = 'smem constant byte address 0x4 - core index']
  #allocation1 [shape = 'u32[144,128]{1,0:T(1,128)}', space=vmem, size = 0x12000, scoped, tag = 'internal scratch']
  %s0 = inlined_call_operand.vmem [shape: f32[8,4], index: 0, kind: input, shape index: {}]
  %s1 = inlined_call_operand.vmem [shape: f32[8,64], index: 1, kind: input, shape index: {}]
  %s2 = inlined_call_operand.hbm [shape: f32[8,128], index: 2, kind: output, shape index: {}]
  %s3 = sld [smem:[#allocation0]]
  $region18: #{tpu_custom_call.1} parent=0
    _
  %s5 = ssub.s32 1, %s3
  %s6 = scalar_select 0, %s5, %s3
  $region1: #{tpu_custom_call.1} parent=0
    #allocation2 [shape = 'u8[4096]{0}', space=vmem, size = 0x1000, scoped, tag = 'output window, operand 0, single buffered']
    #allocation3 [shape = 's32[1]{0}', space=sflag, size = 0x4, scoped, tag = 'scoped memory for tpu_custom_call.1']
    %7 = vsyncpa [#allocation3], 0
    // Predicated region
    $region2: #{tpu_custom_call.1} parent=1 // pred_check
      _
    $region3: #{tpu_custom_call.1} parent=1 // pred_check_branch
      %9 = sbr.rel (0) target = $region5
    $region4: #{tpu_custom_call.1} parent=1 // pred_region
      _
    $region5: #{tpu_custom_call.1} parent=1 // pred_fallthru
      _
    // Predicated region
    $region6: #{tpu_custom_call.1} parent=1 // pred_check
      _
    $region7: #{tpu_custom_call.1} parent=1 // pred_check_branch
      %11 = sbr.rel (0) target = $region9
    $region8: #{tpu_custom_call.1} parent=1 // pred_region
      _
    $region9: #{tpu_custom_call.1} parent=1 // pred_fallthru
      _
    %v12 = vld [vmem:[%s0] sm:$0xff]
    %v13 = vld [vmem:[%s1 + $0x4] sm:$0x1]
    %v14 = vld [vmem:[%s1] sm:$0x1]
    %16 = vset.pattern.permute.xlu0 0
    %17 = vperm.xlu0 %16, %v12
    %v18 = vpop.permute.xlu0 %17
    %v20 = vlaneseq
    %v21 = vshrl.u32 %v20, 7
    %v22 = vsub.s32 0, %v21
    %v23 = vrot.slane %v14, %v22
    %v24 = vmul.f32 %v18, %v23
    %v25 = vlaneseq
    %v26 = vshrl.u32 %v25, 7
    %v27 = vsub.s32 0, %v26
    %v28 = vrot.slane %v13, %v27
    %v29 = vadd.f32 %v28, %v24
    %v30 = vld [vmem:[%s1 + $0x1] sm:$0x1]
    %31 = vset.pattern.permute.xlu0 1
    %32 = vperm.xlu0 %31, %v12
    %v33 = vpop.permute.xlu0 %32
    %v35 = vlaneseq
    %v36 = vshrl.u32 %v35, 7
    %v37 = vsub.s32 0, %v36
    %v38 = vrot.slane %v30, %v37
    %v39 = vmul.f32 %v33, %v38
    %v40 = vadd.f32 %v29, %v39
    %v41 = vld [vmem:[%s1 + $0x2] sm:$0x1]
    %42 = vset.pattern.permute.xlu0 2
    %43 = vperm.xlu0 %42, %v12
    %v44 = vpop.permute.xlu0 %43
    %v46 = vlaneseq
    %v47 = vshrl.u32 %v46, 7
    %v48 = vsub.s32 0, %v47
    %v49 = vrot.slane %v41, %v48
    %v50 = vmul.f32 %v44, %v49
    %v51 = vadd.f32 %v40, %v50
    %v52 = vld [vmem:[%s1 + $0x3] sm:$0x1]
    %53 = vset.pattern.permute.xlu0 3
    %54 = vperm.xlu0 %53, %v12
    %v55 = vpop.permute.xlu0 %54
    %v57 = vlaneseq
    %v58 = vshrl.u32 %v57, 7
    %v59 = vsub.s32 0, %v58
    %v60 = vrot.slane %v52, %v59
    %v61 = vmul.f32 %v55, %v60
    %v62 = vadd.f32 %v51, %v61
    %v63 = vtanh.pop %v62
    %v64 = vld [vmem:[%s1 + $0x7] sm:$0x1]
    %v65 = vld [vmem:[%s1 + $0x5] sm:$0x1]
    %v66 = vlaneseq
    %v67 = vshrl.u32 %v66, 7
    %v68 = vsub.s32 0, %v67
    %v69 = vrot.slane %v65, %v68
    %v70 = vmul.f32 %v63, %v69
    %vm71 = vcmask 523264
    %v72 = vsel %vm71, %v70, 0.0
    %73 = vadd.xlane.f32.xlu0 %v72
    %v74 = vpop.xlane.xlu0 %73
    %v75 = vlaneseq
    %v76 = vshrl.u32 %v75, 7
    %v77 = vsub.s32 0, %v76
    %v78 = vrot.slane %v64, %v77
    %v79 = vadd.f32 %v74, %v78
    %v80 = vld [vmem:[%s1 + $0x6] sm:$0x1]
    %v81 = vlaneseq
    %v82 = vshrl.u32 %v81, 7
    %v83 = vsub.s32 0, %v82
    %v84 = vrot.slane %v80, %v83
    %v85 = vmul.f32 %v63, %v84
    %v86 = vsel %vm71, %v85, 0.0
    %87 = vadd.xlane.f32.xlu0 %v86
    %v88 = vpop.xlane.xlu0 %87
    %v89 = vadd.f32 %v88, %v78
    %91 = vrot.lane.b32.xlu0 %v79, 1
    %v92 = vpop.permute.xlu0 %91
    %vm94 = vcmp.gt.f32.partialorder %v89, %v92
    %v95 = vsel %vm94, 1, 0
    %v96 = vcvt.s32.f32 %v95
    %v97 = vlaneseq
    %v98 = vand.u32 %v97, 127
    %vm99 = vcmp.eq.s32.totalorder %v98, 2
    %101 = vset.pattern.permute.xlu0 1
    %102 = vperm.xlu0 %101, %v96
    %v103 = vpop.permute.xlu0 %102
    %v105 = vsel %vm99, %v103, 0.0
    %vm106 = vcmp.eq.s32.totalorder %v98, 0
    %107 = vset.pattern.permute.xlu0 0
    %108 = vperm.xlu0 %107, %v79
    %v109 = vpop.permute.xlu0 %108
    %v111 = vsel %vm106, %v109, %v105
    %vm112 = vcmp.eq.s32.totalorder %v98, 1
    %114 = vset.pattern.permute.xlu0 1
    %115 = vperm.xlu0 %114, %v89
    %v116 = vpop.permute.xlu0 %115
    %v118 = vsel %vm112, %v116, %v111
    %119 = vst [vmem:[#allocation2] sm:$0xff] %v118
    // Predicated region
    $region10: #{tpu_custom_call.1} parent=1 // pred_check
      _
    $region11: #{tpu_custom_call.1} parent=1 // pred_check_branch
      %121 = sbr.rel (0) target = $region13
    $region12: #{tpu_custom_call.1} parent=1 // pred_region
      %s123 = ssub.s32 128, 128
      %124 = vsyncadd [#allocation3], %s123
      %s126 = sshll.u32 [#allocation2], 4
      %s127 = int_to_ptr.vmem [resolvable:$true] %s126
      %129 = dma.vmem_to_hbm [thread:$0]  %s127, 128, %s2, [#allocation3]
    $region13: #{tpu_custom_call.1} parent=1 // pred_fallthru
      _
    // Predicated region
    $region14: #{tpu_custom_call.1} parent=1 // pred_check
      _
    $region15: #{tpu_custom_call.1} parent=1 // pred_check_branch
      %131 = sbr.rel (0) target = $region17
    $region16: #{tpu_custom_call.1} parent=1 // pred_region
      %132 = dma.done [#allocation3], 128
    $region17: #{tpu_custom_call.1} parent=1 // pred_fallthru
      _
    %133 = vsyncpa [#allocation3], 1

</llo_original>
